<compile_context>
chip_gen: v7x
topology: tpu7x:2x2x1
jax: 0.10.0
libtpu: 0.0.40
codegen_flags: <defaults>
</compile_context>

<pallas_src>
import functools

import jax
import jax.numpy as jnp
from jax.experimental import pallas as pl
from jax.experimental.pallas import tpu as pltpu

LANE = 128      # lane width (last dim alignment)
SUBLANE = 8     # sublane width (second-to-last dim alignment)


def _round_up(n, m):
    return ((n + m - 1) // m) * m


def shallownet_kernel(x_ref, w1_ref, b1_ref, w2_ref, b2_ref, out_ref):
    # fc1: bf16 MXU matmul with f32 accumulation; bias + ReLU stay in f32 (VPU).
    h = jnp.dot(x_ref[...], w1_ref[...], preferred_element_type=jnp.float32)
    h = jnp.maximum(h + b1_ref[...], 0.0)
    # fc2: deliberate single bf16 pack of the activations for the MXU,
    # f32 accumulation, bias add in f32, store f32.
    o = jnp.dot(h.astype(jnp.bfloat16), w2_ref[...],
                preferred_element_type=jnp.float32)
    out_ref[...] = (o + b2_ref[...]).astype(out_ref.dtype)


@functools.partial(jax.jit, static_argnames=("tile_b",))
def shallownet_forward(x, w1, b1, w2, b2, *, tile_b=512):
    """Computes relu(x @ w1 + b1) @ w2 + b2.

    x: (B, D) float32.  w1: (D, H), b1: (1, H), w2: (H, C), b2: (1, C)
    (weights stored as (in, out), i.e. PyTorch Linear weight transposed).
    Returns logits (B, C) float32.
    """
    B, D = x.shape
    H = w1.shape[1]
    C = w2.shape[1]
    Hp = _round_up(H, LANE)
    Cp = _round_up(C, LANE)

    # Zero-pad hidden/output dims: exact, since relu(0 + 0) = 0 rows feed
    # zero-padded w2 rows, and padded output columns are sliced away below.
    w1p = jnp.pad(w1, ((0, 0), (0, Hp - H))).astype(jnp.bfloat16)
    b1p = jnp.pad(b1, ((0, 0), (0, Hp - H)))                        # keep f32
    w2p = jnp.pad(w2, ((0, Hp - H), (0, Cp - C))).astype(jnp.bfloat16)
    b2p = jnp.pad(b2, ((0, 0), (0, Cp - C)))                        # keep f32

    # Batch tiling: weights resident in VMEM, x/out tiles pipelined.
    tile_b = max(SUBLANE, _round_up(min(tile_b, B), SUBLANE))
    Bp = _round_up(B, tile_b)
    xb = x.astype(jnp.bfloat16)
    if Bp != B:
        xb = jnp.pad(xb, ((0, Bp - B), (0, 0)))

    out = pl.pallas_call(
        shallownet_kernel,
        out_shape=jax.ShapeDtypeStruct((Bp, Cp), jnp.float32),
        grid=(Bp // tile_b,),
        in_specs=[
            pl.BlockSpec((tile_b, D), lambda i: (i, 0)),   # activations: tiled
            pl.BlockSpec((D, Hp), lambda i: (0, 0)),       # weights: resident
            pl.BlockSpec((1, Hp), lambda i: (0, 0)),
            pl.BlockSpec((Hp, Cp), lambda i: (0, 0)),
            pl.BlockSpec((1, Cp), lambda i: (0, 0)),
        ],
        out_specs=pl.BlockSpec((tile_b, Cp), lambda i: (i, 0)),
        compiler_params=pltpu.CompilerParams(
            # Batch tiles are independent -> shard across both TCs on v7x.
            dimension_semantics=("parallel",)),
    )(xb, w1p, b1p, w2p, b2p)

    return out[:B, :C]


def init_params(key, input_dim, hidden_dim, num_class):
    """Deterministic init mimicking nn.Linear's kaiming-uniform defaults."""
    k1, k2, k3, k4 = jax.random.split(key, 4)
    bound1 = 1.0 / jnp.sqrt(input_dim)
    bound2 = 1.0 / jnp.sqrt(hidden_dim)
    # stored as (in, out) == PyTorch weight.T
    w1 = jax.random.uniform(k1, (input_dim, hidden_dim), jnp.float32,
                            minval=-bound1, maxval=bound1)
    b1 = jax.random.uniform(k2, (1, hidden_dim), jnp.float32,
                            minval=-bound1, maxval=bound1)
    w2 = jax.random.uniform(k3, (hidden_dim, num_class), jnp.float32,
                            minval=-bound2, maxval=bound2)
    b2 = jax.random.uniform(k4, (1, num_class), jnp.float32,
                            minval=-bound2, maxval=bound2)
    return w1, b1, w2, b2


if __name__ == "__main__":
    input_dim = 64   # matches the module's global `input_dim`
    hidden_dim = 100
    num_class = 10
    batch = 8

    key = jax.random.PRNGKey(0)
    kx, kp = jax.random.split(key)
    x = jax.random.normal(kx, (batch, input_dim), jnp.float32)
    w1, b1, w2, b2 = init_params(kp, input_dim, hidden_dim, num_class)

    out = shallownet_forward(x, w1, b1, w2, b2)
    out = jax.block_until_ready(out)
    assert out.shape == (batch, num_class)

    # Reference with the same bf16-input / f32-accumulate arithmetic.
    ref_bf16 = jnp.maximum(
        jnp.dot(x.astype(jnp.bfloat16), w1.astype(jnp.bfloat16),
                preferred_element_type=jnp.float32) + b1, 0.0)
    ref_bf16 = jnp.dot(ref_bf16.astype(jnp.bfloat16), w2.astype(jnp.bfloat16),
                       preferred_element_type=jnp.float32) + b2
    assert jnp.allclose(out, ref_bf16, atol=1e-2, rtol=1e-2)

    # Loose sanity check against the full-f32 forward pass of the module.
    ref_f32 = jnp.maximum(x @ w1 + b1, 0.0) @ w2 + b2
    assert jnp.allclose(out, ref_f32, atol=5e-2, rtol=5e-2)

    print("KERNEL_OK")
</pallas_src>

<mosaic_0001>
module attributes {stable_mosaic.version = 11 : i64} {
  func.func @shallownet_kernel(%arg0: i32, %arg1: memref<8x64xbf16, #tpu.memory_space<vmem>>, %arg2: memref<64x128xbf16, #tpu.memory_space<vmem>>, %arg3: memref<1x128xf32, #tpu.memory_space<vmem>>, %arg4: memref<128x128xbf16, #tpu.memory_space<vmem>>, %arg5: memref<1x128xf32, #tpu.memory_space<vmem>>, %arg6: memref<8x128xf32, #tpu.memory_space<vmem>>) attributes {dimension_semantics = [#tpu.dimension_semantics<parallel>], iteration_bounds = array<i64: 1>, scalar_prefetch = 0 : i64, scratch_operands = 0 : i64, tpu.core_type = #tpu.core_type<tc>, window_params = [{transform_indices = @transform_0, window_bounds = array<i64: 8, 64>}, {pipeline_mode = #tpu.pipeline_mode<synchronous>, transform_indices = @transform_1, window_bounds = array<i64: 64, 128>}, {pipeline_mode = #tpu.pipeline_mode<synchronous>, transform_indices = @transform_2, window_bounds = array<i64: 1, 128>}, {pipeline_mode = #tpu.pipeline_mode<synchronous>, transform_indices = @transform_3, window_bounds = array<i64: 128, 128>}, {pipeline_mode = #tpu.pipeline_mode<synchronous>, transform_indices = @transform_4, window_bounds = array<i64: 1, 128>}, {transform_indices = @transform_5, window_bounds = array<i64: 8, 128>}]} {
    %c0 = arith.constant 0 : index
    %c0_0 = arith.constant 0 : index
    %0 = vector.load %arg1[%c0, %c0_0] : memref<8x64xbf16, #tpu.memory_space<vmem>>, vector<8x64xbf16>
    %c0_1 = arith.constant 0 : index
    %c0_2 = arith.constant 0 : index
    %1 = vector.load %arg2[%c0_1, %c0_2] : memref<64x128xbf16, #tpu.memory_space<vmem>>, vector<64x128xbf16>
    %cst = arith.constant dense<0.000000e+00> : vector<8x128xf32>
    %2 = tpu.matmul %0, %1, %cst {dimension_numbers = #tpu.dot_dimension_numbers<[1], [0], [0], [1], [0, 0, 1, 1], [], []>} : vector<8x64xbf16>, vector<64x128xbf16>, vector<8x128xf32> -> vector<8x128xf32>
    %c0_3 = arith.constant 0 : index
    %c0_4 = arith.constant 0 : index
    %3 = vector.load %arg3[%c0_3, %c0_4] : memref<1x128xf32, #tpu.memory_space<vmem>>, vector<1x128xf32>
    %4 = vector.broadcast %3 : vector<1x128xf32> to vector<8x128xf32>
    %5 = arith.addf %2, %4 : vector<8x128xf32>
    %cst_5 = arith.constant 0.000000e+00 : f32
    %6 = vector.broadcast %cst_5 : f32 to vector<8x128xf32>
    %7 = arith.maximumf %5, %6 : vector<8x128xf32>
    %8 = arith.truncf %7 : vector<8x128xf32> to vector<8x128xbf16>
    %c0_6 = arith.constant 0 : index
    %c0_7 = arith.constant 0 : index
    %9 = vector.load %arg4[%c0_6, %c0_7] : memref<128x128xbf16, #tpu.memory_space<vmem>>, vector<128x128xbf16>
    %cst_8 = arith.constant dense<0.000000e+00> : vector<8x128xf32>
    %10 = tpu.matmul %8, %9, %cst_8 {dimension_numbers = #tpu.dot_dimension_numbers<[1], [0], [0], [1], [0, 0, 1, 1], [], []>} : vector<8x128xbf16>, vector<128x128xbf16>, vector<8x128xf32> -> vector<8x128xf32>
    %c0_9 = arith.constant 0 : index
    %c0_10 = arith.constant 0 : index
    %11 = vector.load %arg5[%c0_9, %c0_10] : memref<1x128xf32, #tpu.memory_space<vmem>>, vector<1x128xf32>
    %12 = vector.broadcast %11 : vector<1x128xf32> to vector<8x128xf32>
    %13 = arith.addf %10, %12 : vector<8x128xf32>
    %c0_11 = arith.constant 0 : index
    %c0_12 = arith.constant 0 : index
    %14 = vector.load %arg6[%c0_11, %c0_12] : memref<8x128xf32, #tpu.memory_space<vmem>>, vector<8x128xf32>
    tpu.vector_store %arg6[%c0_11, %c0_12], %13 {strides = array<i32>} : memref<8x128xf32, #tpu.memory_space<vmem>>, vector<8x128xf32>,
    return
  }
  func.func @transform_0(%arg0: i32) -> (i32, i32) {
    %c0_i32 = arith.constant 0 : i32
    %c0_i32_0 = arith.constant 0 : i32
    return %arg0, %c0_i32 : i32, i32
  }
  func.func @transform_1(%arg0: i32) -> (i32, i32) {
    %c0_i32 = arith.constant 0 : i32
    %c0_i32_0 = arith.constant 0 : i32
    %c0_i32_1 = arith.constant 0 : i32
    return %c0_i32, %c0_i32_0 : i32, i32
  }
  func.func @transform_2(%arg0: i32) -> (i32, i32) {
    %c0_i32 = arith.constant 0 : i32
    %c0_i32_0 = arith.constant 0 : i32
    %c0_i32_1 = arith.constant 0 : i32
    return %c0_i32, %c0_i32_0 : i32, i32
  }
  func.func @transform_3(%arg0: i32) -> (i32, i32) {
    %c0_i32 = arith.constant 0 : i32
    %c0_i32_0 = arith.constant 0 : i32
    %c0_i32_1 = arith.constant 0 : i32
    return %c0_i32, %c0_i32_0 : i32, i32
  }
  func.func @transform_4(%arg0: i32) -> (i32, i32) {
    %c0_i32 = arith.constant 0 : i32
    %c0_i32_0 = arith.constant 0 : i32
    %c0_i32_1 = arith.constant 0 : i32
    return %c0_i32, %c0_i32_0 : i32, i32
  }
  func.func @transform_5(%arg0: i32) -> (i32, i32) {
    %c0_i32 = arith.constant 0 : i32
    %c0_i32_0 = arith.constant 0 : i32
    return %arg0, %c0_i32 : i32, i32
  }
}

</mosaic_0001>

<llo_original>
// kernel: shallownet_forward.1
$region0: #{shallownet_forward.1}
  #allocation0 [shape = 'u32[]', space=smem, size = 0x4, offset = 0x4, fixed_abs, tag = 'smem constant byte address 0x4 - core index']
  #allocation1 [shape = 'u32[144,128]{1,0:T(1,128)}', space=vmem, size = 0x12000, scoped, tag = 'internal scratch']
  %s0 = inlined_call_operand.vmem [shape: bf16[8,64], index: 0, kind: input, shape index: {}]
  %s1 = inlined_call_operand.vmem [shape: bf16[64,128], index: 1, kind: input, shape index: {}]
  %s2 = inlined_call_operand.vmem [shape: f32[1,128], index: 2, kind: input, shape index: {}]
  %s3 = inlined_call_operand.vmem [shape: bf16[128,128], index: 3, kind: input, shape index: {}]
  %s4 = inlined_call_operand.vmem [shape: f32[1,128], index: 4, kind: input, shape index: {}]
  %s5 = inlined_call_operand.hbm [shape: f32[8,128], index: 5, kind: output, shape index: {}]
  %s6 = sld [smem:[#allocation0]]
  $region30: #{shallownet_forward.1} parent=0
    _
  %s8 = ssub.s32 1, %s6
  %s9 = scalar_select 0, %s8, %s6
  $region1: #{shallownet_forward.1} parent=0
    #allocation2 [shape = 'u8[4096]{0}', space=vmem, size = 0x1000, scoped, tag = 'output window, operand 0, single buffered']
    #allocation3 [shape = 's32[1]{0}', space=sflag, size = 0x4, scoped, tag = 'scoped memory for shallownet_forward.1']
    %10 = vsyncpa [#allocation3], 0
    // Predicated region
    $region2: #{shallownet_forward.1} parent=1 // pred_check
      _
    $region3: #{shallownet_forward.1} parent=1 // pred_check_branch
      %12 = sbr.rel (0) target = $region5
    $region4: #{shallownet_forward.1} parent=1 // pred_region
      _
    $region5: #{shallownet_forward.1} parent=1 // pred_fallthru
      _
    // Predicated region
    $region6: #{shallownet_forward.1} parent=1 // pred_check
      _
    $region7: #{shallownet_forward.1} parent=1 // pred_check_branch
      %14 = sbr.rel (0) target = $region9
    $region8: #{shallownet_forward.1} parent=1 // pred_region
      _
    $region9: #{shallownet_forward.1} parent=1 // pred_fallthru
      _
    // Predicated region
    $region10: #{shallownet_forward.1} parent=1 // pred_check
      _
    $region11: #{shallownet_forward.1} parent=1 // pred_check_branch
      %16 = sbr.rel (0) target = $region13
    $region12: #{shallownet_forward.1} parent=1 // pred_region
      _
    $region13: #{shallownet_forward.1} parent=1 // pred_fallthru
      _
    // Predicated region
    $region14: #{shallownet_forward.1} parent=1 // pred_check
      _
    $region15: #{shallownet_forward.1} parent=1 // pred_check_branch
      %18 = sbr.rel (0) target = $region17
    $region16: #{shallownet_forward.1} parent=1 // pred_region
      _
    $region17: #{shallownet_forward.1} parent=1 // pred_fallthru
      _
    // Predicated region
    $region18: #{shallownet_forward.1} parent=1 // pred_check
      _
    $region19: #{shallownet_forward.1} parent=1 // pred_check_branch
      %20 = sbr.rel (0) target = $region21
    $region20: #{shallownet_forward.1} parent=1 // pred_region
      _
    $region21: #{shallownet_forward.1} parent=1 // pred_fallthru
      _
    %v22 = vld [vmem:[%s0] sm:$0xf]
    %v23 = vld [vmem:[%s1] sm:$0xf]
    %v24 = vld [vmem:[%s1 + $0x4] sm:$0xf]
    %v25 = vld [vmem:[%s1 + $0x8] sm:$0xf]
    %v26 = vld [vmem:[%s1 + $0xc] sm:$0xf]
    %v27 = vld [vmem:[%s1 + $0x10] sm:$0xf]
    %v28 = vld [vmem:[%s1 + $0x14] sm:$0xf]
    %v29 = vld [vmem:[%s1 + $0x18] sm:$0xf]
    %v30 = vld [vmem:[%s1 + $0x1c] sm:$0xf]
    %v31 = vld [vmem:[%s2] sm:$0x1]
    %v33 = vlaneseq
    %v34 = vshrl.u32 %v33, 7
    %v35 = vsub.s32 0, %v34
    %v36 = vrot.slane %v31, %v35
    %v46 = vunpack.c.l.b16 %v23
    %v47 = vunpack.c.l.b16 %v24
    %v48 = vunpack.c.l.b16 %v25
    %v49 = vunpack.c.l.b16 %v26
    %v50 = vunpack.c.l.b16 %v27
    %v51 = vunpack.c.l.b16 %v28
    %v52 = vunpack.c.l.b16 %v29
    %v53 = vunpack.c.l.b16 %v30
    %v54 = vpack.c.b16 %v47, %v46
    %v55 = vpack.c.b16 %v49, %v48
    %v56 = vpack.c.b16 %v51, %v50
    %v57 = vpack.c.b16 %v53, %v52
    %vm62 = vcmask 523264
    %v64 = vsel %vm62, %v22, 0
    %66 = vmatprep.subr.bf16.mxu0 0
    %67 = vmatpush1.bf16.msra.mxu0 %v54
    %68 = vmatprep.subr.bf16.mxu0 0
    %69 = vmatpush1.bf16.msra.mxu0 %v55
    %70 = vmatprep.subr.bf16.mxu0 0
    %71 = vmatpush1.bf16.msra.mxu0 %v56
    %72 = vmatprep.subr.bf16.mxu0 0
    %73 = vmatpush1.bf16.msra.mxu0 %v57
    %74 = vmatprep.subr.bf16.mxu0 0
    %75 = vmatpush1.bf16.msra.mxu0 0
    %76 = vmatprep.subr.bf16.mxu0 0
    %77 = vmatpush1.bf16.msra.mxu0 0
    %78 = vmatprep.subr.bf16.mxu0 0
    %79 = vmatpush1.bf16.msra.mxu0 0
    %80 = vmatprep.subr.bf16.mxu0 0
    %81 = vmatpush1.bf16.msra.mxu0 0
    %82 = vmatprep.subr.bf16.mxu0 0
    %83 = vmatpush1.bf16.msra.mxu0 0
    %84 = vmatprep.subr.bf16.mxu0 0
    %85 = vmatpush1.bf16.msra.mxu0 0
    %86 = vmatprep.subr.bf16.mxu0 0
    %87 = vmatpush1.bf16.msra.mxu0 0
    %88 = vmatprep.subr.bf16.mxu0 0
    %89 = vmatpush1.bf16.msra.mxu0 0
    %90 = vmatprep.subr.bf16.mxu0 0
    %91 = vmatpush1.bf16.msra.mxu0 0
    %92 = vmatprep.subr.bf16.mxu0 0
    %93 = vmatpush1.bf16.msra.mxu0 0
    %94 = vmatprep.subr.bf16.mxu0 0
    %95 = vmatpush1.bf16.msra.mxu0 0
    %96 = vmatprep.subr.bf16.mxu0 0
    %97 = vmatpush1.bf16.msra.mxu0 0
    %98 = vmatprep.mubr.bf16.mxu0 0
    %99 = vmatmul.mubr.bf16.gmra.mrb[0].mxu0 %v64
    %v100 = vpop.f32.mrb[0].mxu0
    %v101 = vadd.f32 %v36, %v100
    %v102 = vpop.f32.mrb[0].mxu0
    %v103 = vpop.f32.mrb[0].mxu0
    %v104 = vpop.f32.mrb[0].mxu0
    %105 = vdwg.mxu0
    %v106 = vmax.f32 %v101, 0.0
    %v107 = vpack.c.bf16 %v106, %v106
    %v108 = vld [vmem:[%s3] sm:$0xf]
    %v109 = vld [vmem:[%s3 + $0x4] sm:$0xf]
    %v110 = vld [vmem:[%s3 + $0x8] sm:$0xf]
    %v111 = vld [vmem:[%s3 + $0xc] sm:$0xf]
    %v112 = vld [vmem:[%s3 + $0x10] sm:$0xf]
    %v113 = vld [vmem:[%s3 + $0x14] sm:$0xf]
    %v114 = vld [vmem:[%s3 + $0x18] sm:$0xf]
    %v115 = vld [vmem:[%s3 + $0x1c] sm:$0xf]
    %v116 = vld [vmem:[%s3 + $0x20] sm:$0xf]
    %v117 = vld [vmem:[%s3 + $0x24] sm:$0xf]
    %v118 = vld [vmem:[%s3 + $0x28] sm:$0xf]
    %v119 = vld [vmem:[%s3 + $0x2c] sm:$0xf]
    %v120 = vld [vmem:[%s3 + $0x30] sm:$0xf]
    %v121 = vld [vmem:[%s3 + $0x34] sm:$0xf]
    %v122 = vld [vmem:[%s3 + $0x38] sm:$0xf]
    %v123 = vld [vmem:[%s3 + $0x3c] sm:$0xf]
    %v124 = vld [vmem:[%s4] sm:$0x1]
    %v126 = vlaneseq
    %v127 = vshrl.u32 %v126, 7
    %v128 = vsub.s32 0, %v127
    %v129 = vrot.slane %v124, %v128
    %v147 = vunpack.c.l.b16 %v108
    %v148 = vunpack.c.l.b16 %v109
    %v149 = vunpack.c.l.b16 %v110
    %v150 = vunpack.c.l.b16 %v111
    %v151 = vunpack.c.l.b16 %v112
    %v152 = vunpack.c.l.b16 %v113
    %v153 = vunpack.c.l.b16 %v114
    %v154 = vunpack.c.l.b16 %v115
    %v155 = vunpack.c.l.b16 %v116
    %v156 = vunpack.c.l.b16 %v117
    %v157 = vunpack.c.l.b16 %v118
    %v158 = vunpack.c.l.b16 %v119
    %v159 = vunpack.c.l.b16 %v120
    %v160 = vunpack.c.l.b16 %v121
    %v161 = vunpack.c.l.b16 %v122
    %v162 = vunpack.c.l.b16 %v123
    %v163 = vpack.c.b16 %v148, %v147
    %v164 = vpack.c.b16 %v150, %v149
    %v165 = vpack.c.b16 %v152, %v151
    %v166 = vpack.c.b16 %v154, %v153
    %v167 = vpack.c.b16 %v156, %v155
    %v168 = vpack.c.b16 %v158, %v157
    %v169 = vpack.c.b16 %v160, %v159
    %v170 = vpack.c.b16 %v162, %v161
    %179 = vmatprep.subr.bf16.mxu0 0
    %180 = vmatpush1.bf16.msra.mxu0 %v163
    %181 = vmatprep.subr.bf16.mxu0 0
    %182 = vmatpush1.bf16.msra.mxu0 %v164
    %183 = vmatprep.subr.bf16.mxu0 0
    %184 = vmatpush1.bf16.msra.mxu0 %v165
    %185 = vmatprep.subr.bf16.mxu0 0
    %186 = vmatpush1.bf16.msra.mxu0 %v166
    %187 = vmatprep.subr.bf16.mxu0 0
    %188 = vmatpush1.bf16.msra.mxu0 %v167
    %189 = vmatprep.subr.bf16.mxu0 0
    %190 = vmatpush1.bf16.msra.mxu0 %v168
    %191 = vmatprep.subr.bf16.mxu0 0
    %192 = vmatpush1.bf16.msra.mxu0 %v169
    %193 = vmatprep.subr.bf16.mxu0 0
    %194 = vmatpush1.bf16.msra.mxu0 %v170
    %195 = vmatprep.subr.bf16.mxu0 0
    %196 = vmatpush1.bf16.msra.mxu0 0
    %197 = vmatprep.subr.bf16.mxu0 0
    %198 = vmatpush1.bf16.msra.mxu0 0
    %199 = vmatprep.subr.bf16.mxu0 0
    %200 = vmatpush1.bf16.msra.mxu0 0
    %201 = vmatprep.subr.bf16.mxu0 0
    %202 = vmatpush1.bf16.msra.mxu0 0
    %203 = vmatprep.subr.bf16.mxu0 0
    %204 = vmatpush1.bf16.msra.mxu0 0
    %205 = vmatprep.subr.bf16.mxu0 0
    %206 = vmatpush1.bf16.msra.mxu0 0
    %207 = vmatprep.subr.bf16.mxu0 0
    %208 = vmatpush1.bf16.msra.mxu0 0
    %209 = vmatprep.subr.bf16.mxu0 0
    %210 = vmatpush1.bf16.msra.mxu0 0
    %211 = vmatprep.mubr.bf16.mxu0 0
    %212 = vmatmul.mubr.bf16.gmra.mrb[0].mxu0 %v107
    %v213 = vpop.f32.mrb[0].mxu0
    %v214 = vadd.f32 %v129, %v213
    %v215 = vpop.f32.mrb[0].mxu0
    %v216 = vpop.f32.mrb[0].mxu0
    %v217 = vpop.f32.mrb[0].mxu0
    %218 = vdwg.mxu0
    %219 = vst [vmem:[#allocation2] sm:$0xff] %v214
    // Predicated region
    $region22: #{shallownet_forward.1} parent=1 // pred_check
      _
    $region23: #{shallownet_forward.1} parent=1 // pred_check_branch
      %221 = sbr.rel (0) target = $region25
    $region24: #{shallownet_forward.1} parent=1 // pred_region
      %s223 = ssub.s32 128, 128
      %224 = vsyncadd [#allocation3], %s223
      %s226 = sshll.u32 [#allocation2], 4
      %s227 = int_to_ptr.vmem [resolvable:$true] %s226
      %229 = dma.vmem_to_hbm [thread:$0]  %s227, 128, %s5, [#allocation3]
    $region25: #{shallownet_forward.1} parent=1 // pred_fallthru
      _
    // Predicated region
    $region26: #{shallownet_forward.1} parent=1 // pred_check
      _
    $region27: #{shallownet_forward.1} parent=1 // pred_check_branch
      %231 = sbr.rel (0) target = $region29
    $region28: #{shallownet_forward.1} parent=1 // pred_region
      %232 = dma.done [#allocation3], 128
    $region29: #{shallownet_forward.1} parent=1 // pred_fallthru
      _
    %233 = vsyncpa [#allocation3], 1

</llo_original>
